<compile_context>
chip_gen: v6e
topology: v6e:2x2x1
jax: 0.10.0
libtpu: 0.0.40
codegen_flags: <defaults>
</compile_context>

<pallas_src>
import jax
import jax.numpy as jnp
from jax.experimental import pallas as pl
from jax.experimental.pallas import tpu as pltpu


def _round_up(x, m):
    return ((x + m - 1) // m) * m


def scoring_kernel(img_ref, art_ref, w1_ref, b1_ref, w2_ref, b2_ref, out_ref):
    E = img_ref.shape[1]

    # Cast the streaming activation tiles to bf16 right before the MXU dots
    # (VPU cast, hidden under the input DMA); no materialized bf16 copies in HBM.
    img = img_ref[...].astype(jnp.bfloat16)
    art = art_ref[...].astype(jnp.bfloat16)
    w1 = w1_ref[...]                                   # (2E, H) bf16, VMEM-resident

    # Fused concat + layer 1: two K=E MXU matmuls on the static halves of W1,
    # f32 accumulation.  Equivalent to cat([img, art], dim=1) @ W1.
    h = jnp.dot(img, w1[:E, :], preferred_element_type=jnp.float32)
    h = h + jnp.dot(art, w1[E:, :], preferred_element_type=jnp.float32)
    h = jnp.maximum(h + b1_ref[...], 0.0)              # bias + ReLU in f32 (VPU)

    # Layer 2 (H -> 1): VPU multiply + lane reduction against the (1, H) w2 row.
    # No (TB, H) transpose; the (TB, 1) result block is a tiny masked store.
    s = jnp.sum(h * w2_ref[...], axis=-1, keepdims=True) + b2_ref[0]
    out_ref[...] = s.astype(out_ref.dtype)


def _vmem_bytes(tb, e, h, in_bytes):
    """Conservative per-call VMEM estimate for tile size tb."""
    stream = 2 * 2 * tb * e * in_bytes          # img + art tiles, double-buffered
    weights = 2 * (2 * e * h * 2 + 2 * h * 4)   # W1 (bf16) + b1/w2 rows (f32), x2 buffers
    out = 2 * tb * 4                            # score tile, double-buffered
    interm = 2 * tb * e * 2 + 3 * tb * h * 4    # bf16 casts + dot results / h (f32)
    return stream + weights + out + interm


def scoring_model(img_emb, art_emb, w1, b1, w2, b2, *, batch_tile=2048):
    """img_emb, art_emb: [B, E] (producer dtype). w1: [2E, H], b1: [H], w2: [H, 1], b2: [1]."""
    B, E = img_emb.shape
    H = w1.shape[1]
    assert art_emb.shape == (B, E) and w1.shape[0] == 2 * E and w2.shape == (H, 1)

    in_bytes = jnp.dtype(img_emb.dtype).itemsize

    # Batch tile: multiple of 128, big enough to amortize per-step overhead, small
    # enough to (a) leave >= 2 grid tiles for v7x's two TensorCores and (b) fit a
    # conservative VMEM budget (v7x: 64 MiB physical / 32 MiB scoped default).
    VMEM_BUDGET = 40 << 20
    TB = _round_up(min(batch_tile, B), 128)
    if B > 128:
        TB = min(TB, _round_up(pl.cdiv(B, 2), 128))
    TB = max(TB, 128)
    while TB > 128 and _vmem_bytes(TB, E, H, in_bytes) > VMEM_BUDGET:
        TB = max(128, _round_up(TB // 2, 128))
    n_tiles = pl.cdiv(B, TB)                    # ragged last tile handled by Pallas
    vmem_limit = min(max(int(_vmem_bytes(TB, E, H, in_bytes) * 1.25) + (2 << 20),
                         32 << 20), 64 << 20)

    # Weights are tiny vs. the activations: one-time bf16 cast / row reshapes here
    # (hoisted under jit in a real pipeline).  Embeddings pass through untouched.
    w1_bf = w1.astype(jnp.bfloat16)                       # (2E, H), VMEM-resident
    b1_row = b1.reshape(1, H).astype(jnp.float32)
    w2_row = w2.reshape(1, H).astype(jnp.float32)
    b2_vec = b2.reshape(1).astype(jnp.float32)

    cost = pl.CostEstimate(
        flops=2 * B * (2 * E) * H + 2 * B * H,
        transcendentals=0,
        bytes_accessed=2 * B * E * in_bytes + 2 * E * H * 2 + 2 * H * 4 + 4 + B * 4,
    )

    out = pl.pallas_call(
        scoring_kernel,
        out_shape=jax.ShapeDtypeStruct((B, 1), jnp.float32),
        grid=(n_tiles,),
        in_specs=[
            pl.BlockSpec((TB, E), lambda i: (i, 0)),             # img tile (streams)
            pl.BlockSpec((TB, E), lambda i: (i, 0)),             # art tile (streams)
            pl.BlockSpec((2 * E, H), lambda i: (0, 0)),          # W1 (resident)
            pl.BlockSpec((1, H), lambda i: (0, 0)),              # b1 (resident)
            pl.BlockSpec((1, H), lambda i: (0, 0)),              # w2 row (resident)
            pl.BlockSpec(memory_space=pltpu.MemorySpace.SMEM),   # b2 scalar
        ],
        out_specs=pl.BlockSpec((TB, 1), lambda i: (i, 0)),
        compiler_params=pltpu.CompilerParams(
            dimension_semantics=("parallel",),                   # megacore on v7x
            vmem_limit_bytes=vmem_limit),
        cost_estimate=cost,
    )(img_emb, art_emb, w1_bf, b1_row, w2_row, b2_vec)

    return out[:, 0]                            # squeeze(1) -> (B,)


def init_params(key, emb_dim, hidden=256):
    """Deterministic PyTorch-style init (uniform +/- 1/sqrt(fan_in))."""
    k1, k2, k3, k4 = jax.random.split(key, 4)
    in1 = emb_dim * 2
    bound1 = 1.0 / jnp.sqrt(in1)
    w1 = jax.random.uniform(k1, (in1, hidden), jnp.float32, -bound1, bound1)
    b1 = jax.random.uniform(k2, (hidden,), jnp.float32, -bound1, bound1)
    bound2 = 1.0 / jnp.sqrt(hidden)
    w2 = jax.random.uniform(k3, (hidden, 1), jnp.float32, -bound2, bound2)
    b2 = jax.random.uniform(k4, (1,), jnp.float32, -bound2, bound2)
    return w1, b1, w2, b2


if __name__ == "__main__":
    key = jax.random.PRNGKey(0)
    k_img, k_art, k_param = jax.random.split(key, 3)

    B, EMB, HID = 200, 128, 256   # small shapes; B deliberately not a tile multiple
    img_emb = jax.random.normal(k_img, (B, EMB), jnp.float32)
    art_emb = jax.random.normal(k_art, (B, EMB), jnp.float32)
    w1, b1, w2, b2 = init_params(k_param, EMB, HID)

    score = scoring_model(img_emb, art_emb, w1, b1, w2, b2)
    score = jax.block_until_ready(score)
    assert score.shape == (B,)

    # Reference with the same bf16 rounding of the layer-1 matmul operands.
    x = jnp.concatenate([img_emb, art_emb], axis=1)
    x_bf = x.astype(jnp.bfloat16).astype(jnp.float32)
    w1_bf = w1.astype(jnp.bfloat16).astype(jnp.float32)
    h = jnp.maximum(
        jnp.dot(x_bf, w1_bf, precision=jax.lax.Precision.HIGHEST) + b1, 0.0)
    ref = (jnp.dot(h, w2, precision=jax.lax.Precision.HIGHEST) + b2)[:, 0]
    err = float(jnp.max(jnp.abs(score - ref)))
    assert jnp.allclose(score, ref, atol=2e-3, rtol=2e-3), err

    print("KERNEL_OK")
</pallas_src>

<mosaic_0001>
module attributes {stable_mosaic.version = 11 : i64} {
  func.func @scoring_kernel(%arg0: i32, %arg1: memref<128x128xf32, #tpu.memory_space<vmem>>, %arg2: memref<128x128xf32, #tpu.memory_space<vmem>>, %arg3: memref<256x256xbf16, #tpu.memory_space<vmem>>, %arg4: memref<1x256xf32, #tpu.memory_space<vmem>>, %arg5: memref<1x256xf32, #tpu.memory_space<vmem>>, %arg6: memref<1xf32, #tpu.memory_space<smem>>, %arg7: memref<128x1xf32, #tpu.memory_space<vmem>>) attributes {dimension_semantics = [#tpu.dimension_semantics<parallel>], iteration_bounds = array<i64: 2>, scalar_prefetch = 0 : i64, scratch_operands = 0 : i64, tpu.core_type = #tpu.core_type<tc>, window_params = [{transform_indices = @transform_0, window_bounds = array<i64: 128, 128>}, {transform_indices = @transform_1, window_bounds = array<i64: 128, 128>}, {pipeline_mode = #tpu.pipeline_mode<synchronous>, transform_indices = @transform_2, window_bounds = array<i64: 256, 256>}, {pipeline_mode = #tpu.pipeline_mode<synchronous>, transform_indices = @transform_3, window_bounds = array<i64: 1, 256>}, {pipeline_mode = #tpu.pipeline_mode<synchronous>, transform_indices = @transform_4, window_bounds = array<i64: 1, 256>}, {transform_indices = @transform_5, window_bounds = array<i64: 1>}, {transform_indices = @transform_6, window_bounds = array<i64: 128, 1>}]} {
    %c0 = arith.constant 0 : index
    %c0_0 = arith.constant 0 : index
    %0 = vector.load %arg1[%c0, %c0_0] : memref<128x128xf32, #tpu.memory_space<vmem>>, vector<128x128xf32>
    %1 = arith.truncf %0 : vector<128x128xf32> to vector<128x128xbf16>
    %c0_1 = arith.constant 0 : index
    %c0_2 = arith.constant 0 : index
    %2 = vector.load %arg2[%c0_1, %c0_2] : memref<128x128xf32, #tpu.memory_space<vmem>>, vector<128x128xf32>
    %3 = arith.truncf %2 : vector<128x128xf32> to vector<128x128xbf16>
    %c0_3 = arith.constant 0 : index
    %c0_4 = arith.constant 0 : index
    %4 = vector.load %arg3[%c0_3, %c0_4] : memref<256x256xbf16, #tpu.memory_space<vmem>>, vector<256x256xbf16>
    %5 = vector.extract_strided_slice %4 {offsets = [0, 0], sizes = [128, 256], strides = [1, 1]} : vector<256x256xbf16> to vector<128x256xbf16>
    %cst = arith.constant dense<0.000000e+00> : vector<128x256xf32>
    %6 = tpu.matmul %1, %5, %cst {dimension_numbers = #tpu.dot_dimension_numbers<[1], [0], [0], [1], [0, 0, 1, 1], [], []>} : vector<128x128xbf16>, vector<128x256xbf16>, vector<128x256xf32> -> vector<128x256xf32>
    %7 = vector.extract_strided_slice %4 {offsets = [128, 0], sizes = [128, 256], strides = [1, 1]} : vector<256x256xbf16> to vector<128x256xbf16>
    %cst_5 = arith.constant dense<0.000000e+00> : vector<128x256xf32>
    %8 = tpu.matmul %3, %7, %cst_5 {dimension_numbers = #tpu.dot_dimension_numbers<[1], [0], [0], [1], [0, 0, 1, 1], [], []>} : vector<128x128xbf16>, vector<128x256xbf16>, vector<128x256xf32> -> vector<128x256xf32>
    %9 = arith.addf %6, %8 : vector<128x256xf32>
    %c0_6 = arith.constant 0 : index
    %c0_7 = arith.constant 0 : index
    %10 = vector.load %arg4[%c0_6, %c0_7] : memref<1x256xf32, #tpu.memory_space<vmem>>, vector<1x256xf32>
    %11 = vector.broadcast %10 : vector<1x256xf32> to vector<128x256xf32>
    %12 = arith.addf %9, %11 : vector<128x256xf32>
    %cst_8 = arith.constant 0.000000e+00 : f32
    %13 = vector.broadcast %cst_8 : f32 to vector<128x256xf32>
    %14 = arith.maximumf %12, %13 : vector<128x256xf32>
    %c0_9 = arith.constant 0 : index
    %c0_10 = arith.constant 0 : index
    %15 = vector.load %arg5[%c0_9, %c0_10] : memref<1x256xf32, #tpu.memory_space<vmem>>, vector<1x256xf32>
    %16 = vector.broadcast %15 : vector<1x256xf32> to vector<128x256xf32>
    %17 = arith.mulf %14, %16 : vector<128x256xf32>
    %cst_11 = arith.constant dense<0.000000e+00> : vector<128xf32>
    %18 = vector.multi_reduction <add>, %17, %cst_11 [1] : vector<128x256xf32> to vector<128xf32>
    %19 = vector.shape_cast %18 : vector<128xf32> to vector<128x1xf32>
    %c0_12 = arith.constant 0 : index
    %20 = memref.load %arg6[%c0_12] : memref<1xf32, #tpu.memory_space<smem>>
    %21 = vector.broadcast %20 : f32 to vector<128x1xf32>
    %22 = arith.addf %19, %21 : vector<128x1xf32>
    %c0_13 = arith.constant 0 : index
    %c0_14 = arith.constant 0 : index
    %23 = vector.load %arg7[%c0_13, %c0_14] : memref<128x1xf32, #tpu.memory_space<vmem>>, vector<128x1xf32>
    tpu.vector_store %arg7[%c0_13, %c0_14], %22 {strides = array<i32>} : memref<128x1xf32, #tpu.memory_space<vmem>>, vector<128x1xf32>,
    return
  }
  func.func @transform_0(%arg0: i32) -> (i32, i32) {
    %c0_i32 = arith.constant 0 : i32
    %c0_i32_0 = arith.constant 0 : i32
    return %arg0, %c0_i32 : i32, i32
  }
  func.func @transform_1(%arg0: i32) -> (i32, i32) {
    %c0_i32 = arith.constant 0 : i32
    %c0_i32_0 = arith.constant 0 : i32
    return %arg0, %c0_i32 : i32, i32
  }
  func.func @transform_2(%arg0: i32) -> (i32, i32) {
    %c0_i32 = arith.constant 0 : i32
    %c0_i32_0 = arith.constant 0 : i32
    %c0_i32_1 = arith.constant 0 : i32
    return %c0_i32, %c0_i32_0 : i32, i32
  }
  func.func @transform_3(%arg0: i32) -> (i32, i32) {
    %c0_i32 = arith.constant 0 : i32
    %c0_i32_0 = arith.constant 0 : i32
    %c0_i32_1 = arith.constant 0 : i32
    return %c0_i32, %c0_i32_0 : i32, i32
  }
  func.func @transform_4(%arg0: i32) -> (i32, i32) {
    %c0_i32 = arith.constant 0 : i32
    %c0_i32_0 = arith.constant 0 : i32
    %c0_i32_1 = arith.constant 0 : i32
    return %c0_i32, %c0_i32_0 : i32, i32
  }
  func.func @transform_5(%arg0: i32) -> i32 {
    %c0_i32 = arith.constant 0 : i32
    %c0_i32_0 = arith.constant 0 : i32
    return %c0_i32 : i32
  }
  func.func @transform_6(%arg0: i32) -> (i32, i32) {
    %c0_i32 = arith.constant 0 : i32
    %c0_i32_0 = arith.constant 0 : i32
    return %arg0, %c0_i32 : i32, i32
  }
}

</mosaic_0001>

<llo_original>
// kernel: tpu_custom_call.1
$region0: #{tpu_custom_call.1}
  #allocation0 [shape = 'u32[]', space=smem, size = 0x4, offset = 0x4, fixed_abs, tag = 'smem constant byte address 0x4 - core index']
  #allocation1 [shape = 'u32[144,128]{1,0:T(1,128)}', space=vmem, size = 0x12000, scoped, tag = 'internal scratch']
  #allocation2 [shape = 'f32[1]{0:T(128)S(6)}', space=smem, size = 0x200, scoped, tag = 'scoped memory for tpu_custom_call.1']
  %s0 = inlined_call_operand.hbm [shape: f32[200,128], index: 0, kind: input, shape index: {}]
  %s1 = inlined_call_operand.hbm [shape: f32[200,128], index: 1, kind: input, shape index: {}]
  %s2 = inlined_call_operand.hbm [shape: bf16[256,256], index: 2, kind: input, shape index: {}]
  %s3 = inlined_call_operand.vmem [shape: f32[1,256], index: 3, kind: input, shape index: {}]
  %s4 = inlined_call_operand.vmem [shape: f32[1,256], index: 4, kind: input, shape index: {}]
  %s5 = inlined_call_operand.<no memory space> [shape: f32[1], index: 5, kind: input, shape index: {}]
  %s6 = inlined_call_operand.vmem [shape: f32[200,1], index: 6, kind: output, shape index: {}]
  %s7 = sld [smem:[#allocation0]]
  $region117: #{tpu_custom_call.1} parent=0
    _
  %s9 = ssub.s32 1, %s7
  %s10 = scalar_select 0, %s9, %s7
  %11 = sst [smem:[#allocation2]] %s5
  $region1: #{tpu_custom_call.1} parent=0
    #allocation3 [shape = 'u8[131072]{0}', space=vmem, size = 0x20000, scoped, tag = 'input window, operand 0']
    #allocation4 [shape = 's32[2]{0}', space=sflag, size = 0x8, scoped, tag = 'scoped memory for tpu_custom_call.1']
    #allocation5 [shape = 'u8[131072]{0}', space=vmem, size = 0x20000, scoped, tag = 'input window, operand 1']
    #allocation6 [shape = 's32[2]{0}', space=sflag, size = 0x8, scoped, tag = 'scoped memory for tpu_custom_call.1']
    #allocation7 [shape = 'u8[131072]{0}', space=vmem, size = 0x20000, scoped, tag = 'input window, operand 2, single buffered']
    #allocation8 [shape = 'u8[131072]{0}', space=vmem, size = 0x20000, scoped, tag = 'output window, operand 0']
    %12 = vsyncpa [#allocation4], 0
    %s13 = scalar_lea.sflag [#allocation4], 1
    %14 = vsyncpa %s13, 0
    %15 = vsyncpa [#allocation6], 0
    %s16 = scalar_lea.sflag [#allocation6], 1
    %17 = vsyncpa %s16, 0
    loop: start=0, step=1, limit=4
    $region2: #{tpu_custom_call.1} parent=1 // loop_pre_header
      _
    $region3: #{tpu_custom_call.1} parent=1 // loop_header
      %s19 = sphi 0, %s23
      %p20 = scmp.ge.s32.totalorder %s19, 4
      %s29 = sphi 0, %s31
      %s32 = sphi 0, %s29
      %s33 = sphi 0, %s32
      %s49 = sphi 0, %s33
      %s55 = sphi 0, %s57
      %s58 = sphi 0, %s55
      %s59 = sphi 0, %s58
      %s75 = sphi 0, %s59
      %s79 = sphi 0, %s79
      %s81 = sphi 0, %s79
      %s82 = sphi 0, %s81
      %s96 = sphi 0, %s82
      %s100 = sphi 0, %s100
      %s102 = sphi 0, %s100
      %s103 = sphi 0, %s102
      %s117 = sphi 0, %s103
      %s121 = sphi 0, %s121
      %s123 = sphi 0, %s121
      %s124 = sphi 0, %s123
      %s138 = sphi 0, %s124
      %s142 = sphi 0, %s142
      %s144 = sphi 0, %s142
      %s145 = sphi 0, %s144
      %s159 = sphi 0, %s145
      %s165 = sphi 0, %s167
      %s168 = sphi 0, %s165
      %s169 = sphi 0, %s168
      %s185 = sphi 0, %s169
    $region4: #{tpu_custom_call.1} parent=1 // loop_header_branch
      %22 = sbr.rel (%p20) target = $region8
    $region5: #{tpu_custom_call.1} parent=1 // loop_body
      %s24 = ssub.s32 %s19, 1
      %s25 = ssub.s32 %s19, 2
      %s26 = sadd.s32 %s19, 1
      %s27 = ssub.s32 %s19, %s26
      %p28 = scmp.eq.s32.totalorder %s27, 0
      %s30 = sadd.s32 %s29, 1
      %s31 = scalar_select %p28, %s29, %s30
      %p34 = pneg %p28
      %p35 = scmp.eq.s32.totalorder %s19, 1
      %p36 = por %p34, %p35
      %p37 = scmp.ne.s32.totalorder %s29, %s32
      %p38 = scmp.eq.s32.totalorder %s19, 0
      %p39 = por %p37, %p38
      %p40 = scmp.ne.s32.totalorder %s29, %s32
      %p41 = scmp.eq.s32.totalorder %s24, 1
      %p42 = por %p40, %p41
      %p43 = scmp.ne.s32.totalorder %s32, %s33
      %p44 = scmp.eq.s32.totalorder %s24, 0
      %p45 = por %p43, %p44
      %p46 = scmp.ne.s32.totalorder %s32, %s33
      %p47 = scmp.eq.s32.totalorder %s25, 1
      %p48 = por %p46, %p47
      %p50 = scmp.ne.s32.totalorder %s33, %s49
      %p51 = scmp.eq.s32.totalorder %s25, 0
      %p52 = por %p50, %p51
      %s53 = ssub.s32 %s19, %s26
      %p54 = scmp.eq.s32.totalorder %s53, 0
      %s56 = sadd.s32 %s55, 1
      %s57 = scalar_select %p54, %s55, %s56
      %p60 = pneg %p54
      %p61 = scmp.eq.s32.totalorder %s19, 1
      %p62 = por %p60, %p61
      %p63 = scmp.ne.s32.totalorder %s55, %s58
      %p64 = scmp.eq.s32.totalorder %s19, 0
      %p65 = por %p63, %p64
      %p66 = scmp.ne.s32.totalorder %s55, %s58
      %p67 = scmp.eq.s32.totalorder %s24, 1
      %p68 = por %p66, %p67
      %p69 = scmp.ne.s32.totalorder %s58, %s59
      %p70 = scmp.eq.s32.totalorder %s24, 0
      %p71 = por %p69, %p70
      %p72 = scmp.ne.s32.totalorder %s58, %s59
      %p73 = scmp.eq.s32.totalorder %s25, 1
      %p74 = por %p72, %p73
      %p76 = scmp.ne.s32.totalorder %s59, %s75
      %p77 = scmp.eq.s32.totalorder %s25, 0
      %p78 = por %p76, %p77
      %s80 = sadd.s32 %s79, 1
      %p83 = scmp.eq.s32.totalorder %s19, 1
      %p84 = scmp.ne.s32.totalorder %s79, %s81
      %p85 = scmp.eq.s32.totalorder %s19, 0
      %p86 = por %p84, %p85
      %p87 = scmp.ne.s32.totalorder %s79, %s81
      %p88 = scmp.eq.s32.totalorder %s24, 1
      %p89 = por %p87, %p88
      %p90 = scmp.ne.s32.totalorder %s81, %s82
      %p91 = scmp.eq.s32.totalorder %s24, 0
      %p92 = por %p90, %p91
      %p93 = scmp.ne.s32.totalorder %s81, %s82
      %p94 = scmp.eq.s32.totalorder %s25, 1
      %p95 = por %p93, %p94
      %p97 = scmp.ne.s32.totalorder %s82, %s96
      %p98 = scmp.eq.s32.totalorder %s25, 0
      %p99 = por %p97, %p98
      %s101 = sadd.s32 %s100, 1
      %p104 = scmp.eq.s32.totalorder %s19, 1
      %p105 = scmp.ne.s32.totalorder %s100, %s102
      %p106 = scmp.eq.s32.totalorder %s19, 0
      %p107 = por %p105, %p106
      %p108 = scmp.ne.s32.totalorder %s100, %s102
      %p109 = scmp.eq.s32.totalorder %s24, 1
      %p110 = por %p108, %p109
      %p111 = scmp.ne.s32.totalorder %s102, %s103
      %p112 = scmp.eq.s32.totalorder %s24, 0
      %p113 = por %p111, %p112
      %p114 = scmp.ne.s32.totalorder %s102, %s103
      %p115 = scmp.eq.s32.totalorder %s25, 1
      %p116 = por %p114, %p115
      %p118 = scmp.ne.s32.totalorder %s103, %s117
      %p119 = scmp.eq.s32.totalorder %s25, 0
      %p120 = por %p118, %p119
      %s122 = sadd.s32 %s121, 1
      %p125 = scmp.eq.s32.totalorder %s19, 1
      %p126 = scmp.ne.s32.totalorder %s121, %s123
      %p127 = scmp.eq.s32.totalorder %s19, 0
      %p128 = por %p126, %p127
      %p129 = scmp.ne.s32.totalorder %s121, %s123
      %p130 = scmp.eq.s32.totalorder %s24, 1
      %p131 = por %p129, %p130
      %p132 = scmp.ne.s32.totalorder %s123, %s124
      %p133 = scmp.eq.s32.totalorder %s24, 0
      %p134 = por %p132, %p133
      %p135 = scmp.ne.s32.totalorder %s123, %s124
      %p136 = scmp.eq.s32.totalorder %s25, 1
      %p137 = por %p135, %p136
      %p139 = scmp.ne.s32.totalorder %s124, %s138
      %p140 = scmp.eq.s32.totalorder %s25, 0
      %p141 = por %p139, %p140
      %s143 = sadd.s32 %s142, 1
      %p146 = scmp.eq.s32.totalorder %s19, 1
      %p147 = scmp.ne.s32.totalorder %s142, %s144
      %p148 = scmp.eq.s32.totalorder %s19, 0
      %p149 = por %p147, %p148
      %p150 = scmp.ne.s32.totalorder %s142, %s144
      %p151 = scmp.eq.s32.totalorder %s24, 1
      %p152 = por %p150, %p151
      %p153 = scmp.ne.s32.totalorder %s144, %s145
      %p154 = scmp.eq.s32.totalorder %s24, 0
      %p155 = por %p153, %p154
      %p156 = scmp.ne.s32.totalorder %s144, %s145
      %p157 = scmp.eq.s32.totalorder %s25, 1
      %p158 = por %p156, %p157
      %p160 = scmp.ne.s32.totalorder %s145, %s159
      %p161 = scmp.eq.s32.totalorder %s25, 0
      %p162 = por %p160, %p161
      %s163 = ssub.s32 %s19, %s26
      %p164 = scmp.eq.s32.totalorder %s163, 0
      %s166 = sadd.s32 %s165, 1
      %s167 = scalar_select %p164, %s165, %s166
      %p170 = pneg %p164
      %p171 = scmp.eq.s32.totalorder %s19, 1
      %p172 = por %p170, %p171
      %p173 = scmp.ne.s32.totalorder %s165, %s168
      %p174 = scmp.eq.s32.totalorder %s19, 0
      %p175 = por %p173, %p174
      %p176 = scmp.ne.s32.totalorder %s165, %s168
      %p177 = scmp.eq.s32.totalorder %s24, 1
      %p178 = por %p176, %p177
      %p179 = scmp.ne.s32.totalorder %s168, %s169
      %p180 = scmp.eq.s32.totalorder %s24, 0
      %p181 = por %p179, %p180
      %p182 = scmp.ne.s32.totalorder %s168, %s169
      %p183 = scmp.eq.s32.totalorder %s25, 1
      %p184 = por %p182, %p183
      %p186 = scmp.ne.s32.totalorder %s169, %s185
      %p187 = scmp.eq.s32.totalorder %s25, 0
      %p188 = por %p186, %p187
      %p189 = scmp.le.s32.totalorder 1, %s19
      %p190 = scmp.lt.s32.totalorder %s19, 3
      %p191 = pnand %p189, %p190
      %p192 = pneg %p191
      // Predicated region
      $region9: #{tpu_custom_call.1} parent=5 // pred_check
        _
      $region10: #{tpu_custom_call.1} parent=5 // pred_check_branch
        %194 = sbr.rel (%p191) target = $region12
      $region11: #{tpu_custom_call.1} parent=5 // pred_region
        %s195 = ssub.s32 %s19, 1
        // Predicated region
        $region13: #{tpu_custom_call.1} parent=11 // pred_check
          %p196 = pneg %p92
        $region14: #{tpu_custom_call.1} parent=11 // pred_check_branch
          %198 = sbr.rel (%p196) target = $region16
        $region15: #{tpu_custom_call.1} parent=11 // pred_region
          %s200 = ssub.s32 4096, 4096
          %201 = vsyncadd [#allocation6], %s200
          %s202 = sshll.u32 [#allocation7], 4
          %s203 = int_to_ptr.vmem [resolvable:$true] %s202
          %208 = dma.hbm_to_vmem [thread:$0]  %s2, 4096, %s203, [#allocation6], 128, 128, 8
        $region16: #{tpu_custom_call.1} parent=11 // pred_fallthru
          _
        // Predicated region
        $region17: #{tpu_custom_call.1} parent=11 // pred_check
          %p209 = pneg %p113
        $region18: #{tpu_custom_call.1} parent=11 // pred_check_branch
          %211 = sbr.rel (%p209) target = $region20
        $region19: #{tpu_custom_call.1} parent=11 // pred_region
          _
        $region20: #{tpu_custom_call.1} parent=11 // pred_fallthru
          _
        // Predicated region
        $region21: #{tpu_custom_call.1} parent=11 // pred_check
          %p212 = pneg %p134
        $region22: #{tpu_custom_call.1} parent=11 // pred_check_branch
          %214 = sbr.rel (%p212) target = $region24
        $region23: #{tpu_custom_call.1} parent=11 // pred_region
          _
        $region24: #{tpu_custom_call.1} parent=11 // pred_fallthru
          _
        // Predicated region
        $region25: #{tpu_custom_call.1} parent=11 // pred_check
          %p215 = pneg %p155
        $region26: #{tpu_custom_call.1} parent=11 // pred_check_branch
          %217 = sbr.rel (%p215) target = $region28
        $region27: #{tpu_custom_call.1} parent=11 // pred_region
          _
        $region28: #{tpu_custom_call.1} parent=11 // pred_fallthru
          _
      $region12: #{tpu_custom_call.1} parent=5 // pred_fallthru
        _
      %p218 = scmp.lt.s32.totalorder %s19, 2
      // Predicated region
      $region29: #{tpu_custom_call.1} parent=5 // pred_check
        %p219 = pneg %p218
      $region30: #{tpu_custom_call.1} parent=5 // pred_check_branch
        %221 = sbr.rel (%p219) target = $region32
      $region31: #{tpu_custom_call.1} parent=5 // pred_region
        // Predicated region
        $region33: #{tpu_custom_call.1} parent=31 // pred_check
          %p222 = pneg %p39
        $region34: #{tpu_custom_call.1} parent=31 // pred_check_branch
          %224 = sbr.rel (%p222) target = $region36
        $region35: #{tpu_custom_call.1} parent=31 // pred_region
          %s225 = sand.u32 %s29, 1
          %s226 = scalar_lea.sflag [#allocation4], %s225
          %s227 = sand.u32 %s29, 1
          %s228 = smul.addr %s227, 128
          %s229 = scalar_lea.vmem [#allocation3], %s228
          %s230 = smul.u32 16, %s19
          %s231 = ssub.s32 25, %s230
          %p232 = scmp.lt.s32.totalorder %s231, 16
          %s233 = scalar_select %p232, %s231, 16
          %s234 = smul.u32 128, %s233
          %s236 = ssub.s32 2048, %s234
          %237 = vsyncadd %s226, %s236
          %p238 = scmp.ne.s32.totalorder 0, %s234
          %s239 = smul.addr %s230, 128
          %s240 = scalar_lea.hbm %s0, %s239
          %s241 = smul.u32 8, %s233
          %s242 = sshll.u32 %s229, 4
          %s243 = int_to_ptr.vmem [resolvable:$true] %s242
          %s244 = sshll.u32 %s241, 4
          %248 = dma.hbm_to_vmem [thread:$0]  (%p238), %s240, %s244, %s243, %s226, 128, 128, 8
        $region36: #{tpu_custom_call.1} parent=31 // pred_fallthru
          _
        // Predicated region
        $region37: #{tpu_custom_call.1} parent=31 // pred_check
          %p249 = pneg %p65
        $region38: #{tpu_custom_call.1} parent=31 // pred_check_branch
          %251 = sbr.rel (%p249) target = $region40
        $region39: #{tpu_custom_call.1} parent=31 // pred_region
          %s252 = sand.u32 %s19, 1
          %s253 = scalar_lea.sflag [#allocation6], %s252
          %s254 = sand.u32 %s55, 1
          %s255 = smul.addr %s254, 128
          %s256 = scalar_lea.vmem [#allocation5], %s255
          %s257 = smul.u32 16, %s19
          %s258 = ssub.s32 25, %s257
          %p259 = scmp.lt.s32.totalorder %s258, 16
          %s260 = scalar_select %p259, %s258, 16
          %s261 = smul.u32 128, %s260
          %s263 = ssub.s32 2048, %s261
          %264 = vsyncadd %s253, %s263
          %p265 = scmp.ne.s32.totalorder 0, %s261
          %s266 = smul.addr %s257, 128
          %s267 = scalar_lea.hbm %s1, %s266
          %s268 = smul.u32 8, %s260
          %s269 = sshll.u32 %s256, 4
          %s270 = int_to_ptr.vmem [resolvable:$true] %s269
          %s271 = sshll.u32 %s268, 4
          %275 = dma.hbm_to_vmem [thread:$0]  (%p265), %s267, %s271, %s270, %s253, 128, 128, 8
        $region40: #{tpu_custom_call.1} parent=31 // pred_fallthru
          _
      $region32: #{tpu_custom_call.1} parent=5 // pred_fallthru
        _
      %p276 = scmp.le.s32.totalorder 1, %s19
      %p277 = scmp.lt.s32.totalorder %s19, 3
      %p278 = pnand %p276, %p277
      %p279 = pneg %p278
      // Predicated region
      $region41: #{tpu_custom_call.1} parent=5 // pred_check
        _
      $region42: #{tpu_custom_call.1} parent=5 // pred_check_branch
        %281 = sbr.rel (%p278) target = $region44
      $region43: #{tpu_custom_call.1} parent=5 // pred_region
        %s282 = ssub.s32 %s19, 1
        %s283 = sand.u32 %s32, 1
        %s284 = scalar_lea.sflag [#allocation4], %s283
        %s285 = sand.u32 %s32, 1
        %s286 = smul.addr %s285, 128
        %s287 = scalar_lea.vmem [#allocation3], %s286
        // Predicated region
        $region45: #{tpu_custom_call.1} parent=43 // pred_check
          %p288 = pneg %p45
        $region46: #{tpu_custom_call.1} parent=43 // pred_check_branch
          %290 = sbr.rel (%p288) target = $region48
        $region47: #{tpu_custom_call.1} parent=43 // pred_region
          %291 = dma.done %s284, 2048
        $region48: #{tpu_custom_call.1} parent=43 // pred_fallthru
          _
        %s292 = sand.u32 %s24, 1
        %s293 = scalar_lea.sflag [#allocation6], %s292
        %s294 = sand.u32 %s58, 1
        %s295 = smul.addr %s294, 128
        %s296 = scalar_lea.vmem [#allocation5], %s295
        // Predicated region
        $region49: #{tpu_custom_call.1} parent=43 // pred_check
          %p297 = pneg %p71
        $region50: #{tpu_custom_call.1} parent=43 // pred_check_branch
          %299 = sbr.rel (%p297) target = $region52
        $region51: #{tpu_custom_call.1} parent=43 // pred_region
          %300 = dma.done %s293, 2048
        $region52: #{tpu_custom_call.1} parent=43 // pred_fallthru
          _
        // Predicated region
        $region53: #{tpu_custom_call.1} parent=43 // pred_check
          %p301 = pneg %p92
        $region54: #{tpu_custom_call.1} parent=43 // pred_check_branch
          %303 = sbr.rel (%p301) target = $region56
        $region55: #{tpu_custom_call.1} parent=43 // pred_region
          %304 = dma.done [#allocation6], 4096
        $region56: #{tpu_custom_call.1} parent=43 // pred_fallthru
          _
        %s305 = sand.u32 %s32, 1
        %s306 = scalar_lea.sflag [#allocation4], %s305
        %s307 = sand.u32 %s32, 1
        %s308 = smul.addr %s307, 128
        %s309 = scalar_lea.vmem [#allocation3], %s308
        %p310 = pneg %p45
        %p311 = pneg %p42
        %s312 = sand.u32 %s24, 1
        %s313 = scalar_lea.sflag [#allocation6], %s312
        %s314 = sand.u32 %s58, 1
        %s315 = smul.addr %s314, 128
        %s316 = scalar_lea.vmem [#allocation5], %s315
        %p317 = pneg %p71
        %p318 = pneg %p68
        %p319 = pneg %p92
        %p320 = pneg %p89
        %p321 = pneg %p113
        %p322 = pneg %p110
        %p323 = pneg %p134
        %p324 = pneg %p131
        %p325 = pneg %p155
        %p326 = pneg %p152
        %p327 = pneg %p181
        %p328 = pneg %p178
        %s329 = sand.u32 %s168, 1
        %s330 = sand.u32 %s168, 1
        %s331 = smul.addr %s330, 128
        %s332 = scalar_lea.vmem [#allocation8], %s331
        %s333 = smul.u32 16, %s24
        %s334 = ssub.s32 25, %s333
        %p335 = scmp.lt.s32.totalorder %s334, 16
        %s336 = scalar_select %p335, %s334, 16
        %s337 = smul.u32 128, %s336
        %s338 = smul.u32 16, %s24
        %s339 = ssub.s32 25, %s338
        %p340 = scmp.lt.s32.totalorder %s339, 16
        %s341 = scalar_select %p340, %s339, 16
        %s342 = smul.u32 128, %s341
        %s343 = smul.u32 16, %s24
        %s344 = ssub.s32 25, %s343
        %p345 = scmp.lt.s32.totalorder %s344, 16
        %s346 = scalar_select %p345, %s344, 16
        %s347 = smul.u32 128, %s346
        %v349 = vld [vmem:[%s287] sm:$0xff]
        %v350 = vld [vmem:[%s287 + $0x8] sm:$0xff]
        %v351 = vld [vmem:[%s287 + $0x10] sm:$0xff]
        %v352 = vld [vmem:[%s287 + $0x18] sm:$0xff]
        %v353 = vld [vmem:[%s287 + $0x20] sm:$0xff]
        %v354 = vld [vmem:[%s287 + $0x28] sm:$0xff]
        %v355 = vld [vmem:[%s287 + $0x30] sm:$0xff]
        %v356 = vld [vmem:[%s287 + $0x38] sm:$0xff]
        %v357 = vld [vmem:[%s287 + $0x40] sm:$0xff]
        %v358 = vld [vmem:[%s287 + $0x48] sm:$0xff]
        %v359 = vld [vmem:[%s287 + $0x50] sm:$0xff]
        %v360 = vld [vmem:[%s287 + $0x58] sm:$0xff]
        %v361 = vld [vmem:[%s287 + $0x60] sm:$0xff]
        %v362 = vld [vmem:[%s287 + $0x68] sm:$0xff]
        %v363 = vld [vmem:[%s287 + $0x70] sm:$0xff]
        %v364 = vld [vmem:[%s287 + $0x78] sm:$0xff]
        %v365 = vpack.c.bf16 %v350, %v349
        %v366 = vpack.c.bf16 %v352, %v351
        %v367 = vpack.c.bf16 %v354, %v353
        %v368 = vpack.c.bf16 %v356, %v355
        %v369 = vpack.c.bf16 %v358, %v357
        %v370 = vpack.c.bf16 %v360, %v359
        %v371 = vpack.c.bf16 %v362, %v361
        %v372 = vpack.c.bf16 %v364, %v363
        %v373 = vld [vmem:[%s296] sm:$0xff]
        %v374 = vld [vmem:[%s296 + $0x8] sm:$0xff]
        %v375 = vld [vmem:[%s296 + $0x10] sm:$0xff]
        %v376 = vld [vmem:[%s296 + $0x18] sm:$0xff]
        %v377 = vld [vmem:[%s296 + $0x20] sm:$0xff]
        %v378 = vld [vmem:[%s296 + $0x28] sm:$0xff]
        %v379 = vld [vmem:[%s296 + $0x30] sm:$0xff]
        %v380 = vld [vmem:[%s296 + $0x38] sm:$0xff]
        %v381 = vld [vmem:[%s296 + $0x40] sm:$0xff]
        %v382 = vld [vmem:[%s296 + $0x48] sm:$0xff]
        %v383 = vld [vmem:[%s296 + $0x50] sm:$0xff]
        %v384 = vld [vmem:[%s296 + $0x58] sm:$0xff]
        %v385 = vld [vmem:[%s296 + $0x60] sm:$0xff]
        %v386 = vld [vmem:[%s296 + $0x68] sm:$0xff]
        %v387 = vld [vmem:[%s296 + $0x70] sm:$0xff]
        %v388 = vld [vmem:[%s296 + $0x78] sm:$0xff]
        %v389 = vpack.c.bf16 %v374, %v373
        %v390 = vpack.c.bf16 %v376, %v375
        %v391 = vpack.c.bf16 %v378, %v377
        %v392 = vpack.c.bf16 %v380, %v379
        %v393 = vpack.c.bf16 %v382, %v381
        %v394 = vpack.c.bf16 %v384, %v383
        %v395 = vpack.c.bf16 %v386, %v385
        %v396 = vpack.c.bf16 %v388, %v387
        %v397 = vld [vmem:[#allocation7] sm:$0xff]
        %v398 = vld [vmem:[#allocation7 + $0x8] sm:$0xff]
        %v399 = vld [vmem:[#allocation7 + $0x10] sm:$0xff]
        %v400 = vld [vmem:[#allocation7 + $0x18] sm:$0xff]
        %v401 = vld [vmem:[#allocation7 + $0x20] sm:$0xff]
        %v402 = vld [vmem:[#allocation7 + $0x28] sm:$0xff]
        %v403 = vld [vmem:[#allocation7 + $0x30] sm:$0xff]
        %v404 = vld [vmem:[#allocation7 + $0x38] sm:$0xff]
        %v405 = vld [vmem:[#allocation7 + $0x40] sm:$0xff]
        %v406 = vld [vmem:[#allocation7 + $0x48] sm:$0xff]
        %v407 = vld [vmem:[#allocation7 + $0x50] sm:$0xff]
        %v408 = vld [vmem:[#allocation7 + $0x58] sm:$0xff]
        %v409 = vld [vmem:[#allocation7 + $0x60] sm:$0xff]
        %v410 = vld [vmem:[#allocation7 + $0x68] sm:$0xff]
        %v411 = vld [vmem:[#allocation7 + $0x70] sm:$0xff]
        %v412 = vld [vmem:[#allocation7 + $0x78] sm:$0xff]
        %v413 = vld [vmem:[#allocation7 + $0x80] sm:$0xff]
        %v414 = vld [vmem:[#allocation7 + $0x88] sm:$0xff]
        %v415 = vld [vmem:[#allocation7 + $0x90] sm:$0xff]
        %v416 = vld [vmem:[#allocation7 + $0x98] sm:$0xff]
        %v417 = vld [vmem:[#allocation7 + $0xa0] sm:$0xff]
        %v418 = vld [vmem:[#allocation7 + $0xa8] sm:$0xff]
        %v419 = vld [vmem:[#allocation7 + $0xb0] sm:$0xff]
        %v420 = vld [vmem:[#allocation7 + $0xb8] sm:$0xff]
        %v421 = vld [vmem:[#allocation7 + $0xc0] sm:$0xff]
        %v422 = vld [vmem:[#allocation7 + $0xc8] sm:$0xff]
        %v423 = vld [vmem:[#allocation7 + $0xd0] sm:$0xff]
        %v424 = vld [vmem:[#allocation7 + $0xd8] sm:$0xff]
        %v425 = vld [vmem:[#allocation7 + $0xe0] sm:$0xff]
        %v426 = vld [vmem:[#allocation7 + $0xe8] sm:$0xff]
        %v427 = vld [vmem:[#allocation7 + $0xf0] sm:$0xff]
        %v428 = vld [vmem:[#allocation7 + $0xf8] sm:$0xff]
        %v445 = vunpack.c.l.b16 %v413
        %v446 = vunpack.c.h.b16 %v413
        %v447 = vunpack.c.l.b16 %v414
        %v448 = vunpack.c.h.b16 %v414
        %v449 = vunpack.c.l.b16 %v415
        %v450 = vunpack.c.h.b16 %v415
        %v451 = vunpack.c.l.b16 %v416
        %v452 = vunpack.c.h.b16 %v416
        %v453 = vunpack.c.l.b16 %v417
        %v454 = vunpack.c.h.b16 %v417
        %v455 = vunpack.c.l.b16 %v418
        %v456 = vunpack.c.h.b16 %v418
        %v457 = vunpack.c.l.b16 %v419
        %v458 = vunpack.c.h.b16 %v419
        %v459 = vunpack.c.l.b16 %v420
        %v460 = vunpack.c.h.b16 %v420
        %v461 = vunpack.c.l.b16 %v421
        %v462 = vunpack.c.h.b16 %v421
        %v463 = vunpack.c.l.b16 %v422
        %v464 = vunpack.c.h.b16 %v422
        %v465 = vunpack.c.l.b16 %v423
        %v466 = vunpack.c.h.b16 %v423
        %v467 = vunpack.c.l.b16 %v424
        %v468 = vunpack.c.h.b16 %v424
        %v469 = vunpack.c.l.b16 %v425
        %v470 = vunpack.c.h.b16 %v425
        %v471 = vunpack.c.l.b16 %v426
        %v472 = vunpack.c.h.b16 %v426
        %v473 = vunpack.c.l.b16 %v427
        %v474 = vunpack.c.h.b16 %v427
        %v475 = vunpack.c.l.b16 %v428
        %v476 = vunpack.c.h.b16 %v428
        %v477 = vpack.c.b16 %v447, %v445
        %v478 = vpack.c.b16 %v448, %v446
        %v479 = vpack.c.b16 %v451, %v449
        %v480 = vpack.c.b16 %v452, %v450
        %v481 = vpack.c.b16 %v455, %v453
        %v482 = vpack.c.b16 %v456, %v454
        %v483 = vpack.c.b16 %v459, %v457
        %v484 = vpack.c.b16 %v460, %v458
        %v485 = vpack.c.b16 %v463, %v461
        %v486 = vpack.c.b16 %v464, %v462
        %v487 = vpack.c.b16 %v467, %v465
        %v488 = vpack.c.b16 %v468, %v466
        %v489 = vpack.c.b16 %v471, %v469
        %v490 = vpack.c.b16 %v472, %v470
        %v491 = vpack.c.b16 %v475, %v473
        %v492 = vpack.c.b16 %v476, %v474
        %509 = vmatprep.subr.bf16.mxu0 %v492
        %510 = vmatpush1.bf16.msra.mxu0 %v491
        %511 = vmatprep.subr.bf16.mxu0 %v490
        %512 = vmatpush1.bf16.msra.mxu0 %v489
        %513 = vmatprep.subr.bf16.mxu0 %v488
        %514 = vmatpush1.bf16.msra.mxu0 %v487
        %515 = vmatprep.subr.bf16.mxu0 %v486
        %516 = vmatpush1.bf16.msra.mxu0 %v485
        %517 = vmatprep.subr.bf16.mxu0 %v484
        %518 = vmatpush1.bf16.msra.mxu0 %v483
        %519 = vmatprep.subr.bf16.mxu0 %v482
        %520 = vmatpush1.bf16.msra.mxu0 %v481
        %521 = vmatprep.subr.bf16.mxu0 %v480
        %522 = vmatpush1.bf16.msra.mxu0 %v479
        %523 = vmatprep.subr.bf16.mxu0 %v478
        %524 = vmatpush1.bf16.msra.mxu0 %v477
        %525 = vmatprep.subr.bf16.mxu0 0
        %526 = vmatpush2.bf16.msra.mxu0 0
        %527 = vmatprep.subr.bf16.mxu0 0
        %528 = vmatpush2.bf16.msra.mxu0 0
        %529 = vmatprep.subr.bf16.mxu0 0
        %530 = vmatpush2.bf16.msra.mxu0 0
        %531 = vmatprep.subr.bf16.mxu0 0
        %532 = vmatpush2.bf16.msra.mxu0 0
        %533 = vmatprep.subr.bf16.mxu0 0
        %534 = vmatpush2.bf16.msra.mxu0 0
        %535 = vmatprep.subr.bf16.mxu0 0
        %536 = vmatpush2.bf16.msra.mxu0 0
        %537 = vmatprep.subr.bf16.mxu0 0
        %538 = vmatpush2.bf16.msra.mxu0 0
        %539 = vmatprep.subr.bf16.mxu0 0
        %540 = vmatpush2.bf16.msra.mxu0 0
        %541 = vmatprep.mubr.bf16.mxu0 0
        %542 = vmatmul.mubr.bf16.gmra.mxu0 %v389
        %v543 = vpop.f32.mrf.mxu0
        %v544 = vadd.f32 0.0, %v543
        %v545 = vpop.f32.mrf.mxu0
        %v546 = vadd.f32 0.0, %v545
        %v547 = vpop.f32.mrf.mxu0
        %v548 = vadd.f32 0.0, %v547
        %v549 = vpop.f32.mrf.mxu0
        %v550 = vadd.f32 0.0, %v549
        %551 = vmatprep.mubr.bf16.mxu0 0
        %552 = vmatmul.mubr.bf16.gmra.mxu0 %v390
        %v553 = vpop.f32.mrf.mxu0
        %v554 = vadd.f32 0.0, %v553
        %v555 = vpop.f32.mrf.mxu0
        %v556 = vadd.f32 0.0, %v555
        %v557 = vpop.f32.mrf.mxu0
        %v558 = vadd.f32 0.0, %v557
        %v559 = vpop.f32.mrf.mxu0
        %v560 = vadd.f32 0.0, %v559
        %561 = vmatprep.mubr.bf16.mxu0 0
        %562 = vmatmul.mubr.bf16.gmra.mxu0 %v391
        %v563 = vpop.f32.mrf.mxu0
        %v564 = vadd.f32 0.0, %v563
        %v565 = vpop.f32.mrf.mxu0
        %v566 = vadd.f32 0.0, %v565
        %v567 = vpop.f32.mrf.mxu0
        %v568 = vadd.f32 0.0, %v567
        %v569 = vpop.f32.mrf.mxu0
        %v570 = vadd.f32 0.0, %v569
        %571 = vmatprep.mubr.bf16.mxu0 0
        %572 = vmatmul.mubr.bf16.gmra.mxu0 %v392
        %v573 = vpop.f32.mrf.mxu0
        %v574 = vadd.f32 0.0, %v573
        %v575 = vpop.f32.mrf.mxu0
        %v576 = vadd.f32 0.0, %v575
        %v577 = vpop.f32.mrf.mxu0
        %v578 = vadd.f32 0.0, %v577
        %v579 = vpop.f32.mrf.mxu0
        %v580 = vadd.f32 0.0, %v579
        %581 = vmatprep.mubr.bf16.mxu0 0
        %582 = vmatmul.mubr.bf16.gmra.mxu0 %v393
        %v583 = vpop.f32.mrf.mxu0
        %v584 = vadd.f32 0.0, %v583
        %v585 = vpop.f32.mrf.mxu0
        %v586 = vadd.f32 0.0, %v585
        %v587 = vpop.f32.mrf.mxu0
        %v588 = vadd.f32 0.0, %v587
        %v589 = vpop.f32.mrf.mxu0
        %v590 = vadd.f32 0.0, %v589
        %591 = vmatprep.mubr.bf16.mxu0 0
        %592 = vmatmul.mubr.bf16.gmra.mxu0 %v394
        %v593 = vpop.f32.mrf.mxu0
        %v594 = vadd.f32 0.0, %v593
        %v595 = vpop.f32.mrf.mxu0
        %v596 = vadd.f32 0.0, %v595
        %v597 = vpop.f32.mrf.mxu0
        %v598 = vadd.f32 0.0, %v597
        %v599 = vpop.f32.mrf.mxu0
        %v600 = vadd.f32 0.0, %v599
        %601 = vmatprep.mubr.bf16.mxu0 0
        %602 = vmatmul.mubr.bf16.gmra.mxu0 %v395
        %v603 = vpop.f32.mrf.mxu0
        %v604 = vadd.f32 0.0, %v603
        %v605 = vpop.f32.mrf.mxu0
        %v606 = vadd.f32 0.0, %v605
        %v607 = vpop.f32.mrf.mxu0
        %v608 = vadd.f32 0.0, %v607
        %v609 = vpop.f32.mrf.mxu0
        %v610 = vadd.f32 0.0, %v609
        %611 = vmatprep.mubr.bf16.mxu0 0
        %612 = vmatmul.mubr.bf16.gmra.mxu0 %v396
        %v613 = vpop.f32.mrf.mxu0
        %v614 = vadd.f32 0.0, %v613
        %v615 = vpop.f32.mrf.mxu0
        %v616 = vadd.f32 0.0, %v615
        %v617 = vpop.f32.mrf.mxu0
        %v618 = vadd.f32 0.0, %v617
        %v619 = vpop.f32.mrf.mxu0
        %v620 = vadd.f32 0.0, %v619
        %621 = vdwg.mxu0
        %v638 = vunpack.c.l.b16 %v397
        %v639 = vunpack.c.h.b16 %v397
        %v640 = vunpack.c.l.b16 %v398
        %v641 = vunpack.c.h.b16 %v398
        %v642 = vunpack.c.l.b16 %v399
        %v643 = vunpack.c.h.b16 %v399
        %v644 = vunpack.c.l.b16 %v400
        %v645 = vunpack.c.h.b16 %v400
        %v646 = vunpack.c.l.b16 %v401
        %v647 = vunpack.c.h.b16 %v401
        %v648 = vunpack.c.l.b16 %v402
        %v649 = vunpack.c.h.b16 %v402
        %v650 = vunpack.c.l.b16 %v403
        %v651 = vunpack.c.h.b16 %v403
        %v652 = vunpack.c.l.b16 %v404
        %v653 = vunpack.c.h.b16 %v404
        %v654 = vunpack.c.l.b16 %v405
        %v655 = vunpack.c.h.b16 %v405
        %v656 = vunpack.c.l.b16 %v406
        %v657 = vunpack.c.h.b16 %v406
        %v658 = vunpack.c.l.b16 %v407
        %v659 = vunpack.c.h.b16 %v407
        %v660 = vunpack.c.l.b16 %v408
        %v661 = vunpack.c.h.b16 %v408
        %v662 = vunpack.c.l.b16 %v409
        %v663 = vunpack.c.h.b16 %v409
        %v664 = vunpack.c.l.b16 %v410
        %v665 = vunpack.c.h.b16 %v410
        %v666 = vunpack.c.l.b16 %v411
        %v667 = vunpack.c.h.b16 %v411
        %v668 = vunpack.c.l.b16 %v412
        %v669 = vunpack.c.h.b16 %v412
        %v670 = vpack.c.b16 %v640, %v638
        %v671 = vpack.c.b16 %v641, %v639
        %v672 = vpack.c.b16 %v644, %v642
        %v673 = vpack.c.b16 %v645, %v643
        %v674 = vpack.c.b16 %v648, %v646
        %v675 = vpack.c.b16 %v649, %v647
        %v676 = vpack.c.b16 %v652, %v650
        %v677 = vpack.c.b16 %v653, %v651
        %v678 = vpack.c.b16 %v656, %v654
        %v679 = vpack.c.b16 %v657, %v655
        %v680 = vpack.c.b16 %v660, %v658
        %v681 = vpack.c.b16 %v661, %v659
        %v682 = vpack.c.b16 %v664, %v662
        %v683 = vpack.c.b16 %v665, %v663
        %v684 = vpack.c.b16 %v668, %v666
        %v685 = vpack.c.b16 %v669, %v667
        %702 = vmatprep.subr.bf16.mxu0 %v685
        %703 = vmatpush1.bf16.msra.mxu0 %v684
        %704 = vmatprep.subr.bf16.mxu0 %v683
        %705 = vmatpush1.bf16.msra.mxu0 %v682
        %706 = vmatprep.subr.bf16.mxu0 %v681
        %707 = vmatpush1.bf16.msra.mxu0 %v680
        %708 = vmatprep.subr.bf16.mxu0 %v679
        %709 = vmatpush1.bf16.msra.mxu0 %v678
        %710 = vmatprep.subr.bf16.mxu0 %v677
        %711 = vmatpush1.bf16.msra.mxu0 %v676
        %712 = vmatprep.subr.bf16.mxu0 %v675
        %713 = vmatpush1.bf16.msra.mxu0 %v674
        %714 = vmatprep.subr.bf16.mxu0 %v673
        %715 = vmatpush1.bf16.msra.mxu0 %v672
        %716 = vmatprep.subr.bf16.mxu0 %v671
        %717 = vmatpush1.bf16.msra.mxu0 %v670
        %718 = vmatprep.subr.bf16.mxu0 0
        %719 = vmatpush2.bf16.msra.mxu0 0
        %720 = vmatprep.subr.bf16.mxu0 0
        %721 = vmatpush2.bf16.msra.mxu0 0
        %722 = vmatprep.subr.bf16.mxu0 0
        %723 = vmatpush2.bf16.msra.mxu0 0
        %724 = vmatprep.subr.bf16.mxu0 0
        %725 = vmatpush2.bf16.msra.mxu0 0
        %726 = vmatprep.subr.bf16.mxu0 0
        %727 = vmatpush2.bf16.msra.mxu0 0
        %728 = vmatprep.subr.bf16.mxu0 0
        %729 = vmatpush2.bf16.msra.mxu0 0
        %730 = vmatprep.subr.bf16.mxu0 0
        %731 = vmatpush2.bf16.msra.mxu0 0
        %732 = vmatprep.subr.bf16.mxu0 0
        %733 = vmatpush2.bf16.msra.mxu0 0
        %734 = vmatprep.mubr.bf16.mxu0 0
        %735 = vmatmul.mubr.bf16.gmra.mxu0 %v365
        %v736 = vpop.f32.mrf.mxu0
        %v737 = vadd.f32 %v544, %v736
        %v738 = vpop.f32.mrf.mxu0
        %v739 = vadd.f32 %v546, %v738
        %v740 = vpop.f32.mrf.mxu0
        %v741 = vadd.f32 %v548, %v740
        %v742 = vpop.f32.mrf.mxu0
        %v743 = vadd.f32 %v550, %v742
        %744 = vmatprep.mubr.bf16.mxu0 0
        %745 = vmatmul.mubr.bf16.gmra.mxu0 %v366
        %v746 = vpop.f32.mrf.mxu0
        %v747 = vadd.f32 %v554, %v746
        %v748 = vpop.f32.mrf.mxu0
        %v749 = vadd.f32 %v556, %v748
        %v750 = vpop.f32.mrf.mxu0
        %v751 = vadd.f32 %v558, %v750
        %v752 = vpop.f32.mrf.mxu0
        %v753 = vadd.f32 %v560, %v752
        %754 = vmatprep.mubr.bf16.mxu0 0
        %755 = vmatmul.mubr.bf16.gmra.mxu0 %v367
        %v756 = vpop.f32.mrf.mxu0
        %v757 = vadd.f32 %v564, %v756
        %v758 = vpop.f32.mrf.mxu0
        %v759 = vadd.f32 %v566, %v758
        %v760 = vpop.f32.mrf.mxu0
        %v761 = vadd.f32 %v568, %v760
        %v762 = vpop.f32.mrf.mxu0
        %v763 = vadd.f32 %v570, %v762
        %764 = vmatprep.mubr.bf16.mxu0 0
        %765 = vmatmul.mubr.bf16.gmra.mxu0 %v368
        %v766 = vpop.f32.mrf.mxu0
        %v767 = vadd.f32 %v574, %v766
        %v768 = vpop.f32.mrf.mxu0
        %v769 = vadd.f32 %v576, %v768
        %v770 = vpop.f32.mrf.mxu0
        %v771 = vadd.f32 %v578, %v770
        %v772 = vpop.f32.mrf.mxu0
        %v773 = vadd.f32 %v580, %v772
        %774 = vmatprep.mubr.bf16.mxu0 0
        %775 = vmatmul.mubr.bf16.gmra.mxu0 %v369
        %v776 = vpop.f32.mrf.mxu0
        %v777 = vadd.f32 %v584, %v776
        %v778 = vpop.f32.mrf.mxu0
        %v779 = vadd.f32 %v586, %v778
        %v780 = vpop.f32.mrf.mxu0
        %v781 = vadd.f32 %v588, %v780
        %v782 = vpop.f32.mrf.mxu0
        %v783 = vadd.f32 %v590, %v782
        %784 = vmatprep.mubr.bf16.mxu0 0
        %785 = vmatmul.mubr.bf16.gmra.mxu0 %v370
        %v786 = vpop.f32.mrf.mxu0
        %v787 = vadd.f32 %v594, %v786
        %v788 = vpop.f32.mrf.mxu0
        %v789 = vadd.f32 %v596, %v788
        %v790 = vpop.f32.mrf.mxu0
        %v791 = vadd.f32 %v598, %v790
        %v792 = vpop.f32.mrf.mxu0
        %v793 = vadd.f32 %v600, %v792
        %794 = vmatprep.mubr.bf16.mxu0 0
        %795 = vmatmul.mubr.bf16.gmra.mxu0 %v371
        %v796 = vpop.f32.mrf.mxu0
        %v797 = vadd.f32 %v604, %v796
        %v798 = vpop.f32.mrf.mxu0
        %v799 = vadd.f32 %v606, %v798
        %v800 = vpop.f32.mrf.mxu0
        %v801 = vadd.f32 %v608, %v800
        %v802 = vpop.f32.mrf.mxu0
        %v803 = vadd.f32 %v610, %v802
        %804 = vmatprep.mubr.bf16.mxu0 0
        %805 = vmatmul.mubr.bf16.gmra.mxu0 %v372
        %v806 = vpop.f32.mrf.mxu0
        %v807 = vadd.f32 %v614, %v806
        %v808 = vpop.f32.mrf.mxu0
        %v809 = vadd.f32 %v616, %v808
        %v810 = vpop.f32.mrf.mxu0
        %v811 = vadd.f32 %v618, %v810
        %v812 = vpop.f32.mrf.mxu0
        %v813 = vadd.f32 %v620, %v812
        %814 = vdwg.mxu0
        %v815 = vld [vmem:[%s3] sm:$0x3]
        %v817 = vlaneseq
        %v818 = vshrl.u32 %v817, 7
        %v819 = vsub.s32 0, %v818
        %v820 = vrot.slane %v815, %v819
        %v821 = vlaneseq
        %v822 = vshrl.u32 %v821, 7
        %v823 = vsub.s32 1, %v822
        %v824 = vrot.slane %v815, %v823
        %v827 = vadd.f32 %v737, %v820
        %v828 = vadd.f32 %v739, %v824
        %v829 = vadd.f32 %v741, %v820
        %v830 = vadd.f32 %v743, %v824
        %v831 = vadd.f32 %v747, %v820
        %v832 = vadd.f32 %v749, %v824
        %v833 = vadd.f32 %v751, %v820
        %v834 = vadd.f32 %v753, %v824
        %v835 = vadd.f32 %v757, %v820
        %v836 = vadd.f32 %v759, %v824
        %v837 = vadd.f32 %v761, %v820
        %v838 = vadd.f32 %v763, %v824
        %v839 = vadd.f32 %v767, %v820
        %v840 = vadd.f32 %v769, %v824
        %v841 = vadd.f32 %v771, %v820
        %v842 = vadd.f32 %v773, %v824
        %v843 = vadd.f32 %v777, %v820
        %v844 = vadd.f32 %v779, %v824
        %v845 = vadd.f32 %v781, %v820
        %v846 = vadd.f32 %v783, %v824
        %v847 = vadd.f32 %v787, %v820
        %v848 = vadd.f32 %v789, %v824
        %v849 = vadd.f32 %v791, %v820
        %v850 = vadd.f32 %v793, %v824
        %v851 = vadd.f32 %v797, %v820
        %v852 = vadd.f32 %v799, %v824
        %v853 = vadd.f32 %v801, %v820
        %v854 = vadd.f32 %v803, %v824
        %v855 = vadd.f32 %v807, %v820
        %v856 = vadd.f32 %v809, %v824
        %v857 = vadd.f32 %v811, %v820
        %v858 = vadd.f32 %v813, %v824
        %v859 = vmax.f32 %v827, 0.0
        %v860 = vmax.f32 %v828, 0.0
        %v861 = vmax.f32 %v829, 0.0
        %v862 = vmax.f32 %v830, 0.0
        %v863 = vmax.f32 %v831, 0.0
        %v864 = vmax.f32 %v832, 0.0
        %v865 = vmax.f32 %v833, 0.0
        %v866 = vmax.f32 %v834, 0.0
        %v867 = vmax.f32 %v835, 0.0
        %v868 = vmax.f32 %v836, 0.0
        %v869 = vmax.f32 %v837, 0.0
        %v870 = vmax.f32 %v838, 0.0
        %v871 = vmax.f32 %v839, 0.0
        %v872 = vmax.f32 %v840, 0.0
        %v873 = vmax.f32 %v841, 0.0
        %v874 = vmax.f32 %v842, 0.0
        %v875 = vmax.f32 %v843, 0.0
        %v876 = vmax.f32 %v844, 0.0
        %v877 = vmax.f32 %v845, 0.0
        %v878 = vmax.f32 %v846, 0.0
        %v879 = vmax.f32 %v847, 0.0
        %v880 = vmax.f32 %v848, 0.0
        %v881 = vmax.f32 %v849, 0.0
        %v882 = vmax.f32 %v850, 0.0
        %v883 = vmax.f32 %v851, 0.0
        %v884 = vmax.f32 %v852, 0.0
        %v885 = vmax.f32 %v853, 0.0
        %v886 = vmax.f32 %v854, 0.0
        %v887 = vmax.f32 %v855, 0.0
        %v888 = vmax.f32 %v856, 0.0
        %v889 = vmax.f32 %v857, 0.0
        %v890 = vmax.f32 %v858, 0.0
        %v891 = vld [vmem:[%s4] sm:$0x3]
        %v893 = vlaneseq
        %v894 = vshrl.u32 %v893, 7
        %v895 = vsub.s32 0, %v894
        %v896 = vrot.slane %v891, %v895
        %v897 = vlaneseq
        %v898 = vshrl.u32 %v897, 7
        %v899 = vsub.s32 1, %v898
        %v900 = vrot.slane %v891, %v899
        %v903 = vmul.f32 %v859, %v896
        %v904 = vmul.f32 %v860, %v900
        %v905 = vmul.f32 %v861, %v896
        %v906 = vmul.f32 %v862, %v900
        %v907 = vmul.f32 %v863, %v896
        %v908 = vmul.f32 %v864, %v900
        %v909 = vmul.f32 %v865, %v896
        %v910 = vmul.f32 %v866, %v900
        %v911 = vmul.f32 %v867, %v896
        %v912 = vmul.f32 %v868, %v900
        %v913 = vmul.f32 %v869, %v896
        %v914 = vmul.f32 %v870, %v900
        %v915 = vmul.f32 %v871, %v896
        %v916 = vmul.f32 %v872, %v900
        %v917 = vmul.f32 %v873, %v896
        %v918 = vmul.f32 %v874, %v900
        %v919 = vmul.f32 %v875, %v896
        %v920 = vmul.f32 %v876, %v900
        %v921 = vmul.f32 %v877, %v896
        %v922 = vmul.f32 %v878, %v900
        %v923 = vmul.f32 %v879, %v896
        %v924 = vmul.f32 %v880, %v900
        %v925 = vmul.f32 %v881, %v896
        %v926 = vmul.f32 %v882, %v900
        %v927 = vmul.f32 %v883, %v896
        %v928 = vmul.f32 %v884, %v900
        %v929 = vmul.f32 %v885, %v896
        %v930 = vmul.f32 %v886, %v900
        %v931 = vmul.f32 %v887, %v896
        %v932 = vmul.f32 %v888, %v900
        %v933 = vmul.f32 %v889, %v896
        %v934 = vmul.f32 %v890, %v900
        %v935 = vadd.f32 %v903, %v904
        %936 = vadd.xlane.f32.xlu0 %v935
        %v937 = vpop.xlane.xlu0 %936
        %v938 = vadd.f32 %v905, %v906
        %939 = vadd.xlane.f32.xlu0 %v938
        %v940 = vpop.xlane.xlu0 %939
        %v941 = vadd.f32 %v907, %v908
        %942 = vadd.xlane.f32.xlu0 %v941
        %v943 = vpop.xlane.xlu0 %942
        %v944 = vadd.f32 %v909, %v910
        %945 = vadd.xlane.f32.xlu0 %v944
        %v946 = vpop.xlane.xlu0 %945
        %v947 = vadd.f32 %v911, %v912
        %948 = vadd.xlane.f32.xlu0 %v947
        %v949 = vpop.xlane.xlu0 %948
        %v950 = vadd.f32 %v913, %v914
        %951 = vadd.xlane.f32.xlu0 %v950
        %v952 = vpop.xlane.xlu0 %951
        %v953 = vadd.f32 %v915, %v916
        %954 = vadd.xlane.f32.xlu0 %v953
        %v955 = vpop.xlane.xlu0 %954
        %v956 = vadd.f32 %v917, %v918
        %957 = vadd.xlane.f32.xlu0 %v956
        %v958 = vpop.xlane.xlu0 %957
        %v959 = vadd.f32 %v919, %v920
        %960 = vadd.xlane.f32.xlu0 %v959
        %v961 = vpop.xlane.xlu0 %960
        %v962 = vadd.f32 %v921, %v922
        %963 = vadd.xlane.f32.xlu0 %v962
        %v964 = vpop.xlane.xlu0 %963
        %v965 = vadd.f32 %v923, %v924
        %966 = vadd.xlane.f32.xlu0 %v965
        %v967 = vpop.xlane.xlu0 %966
        %v968 = vadd.f32 %v925, %v926
        %969 = vadd.xlane.f32.xlu0 %v968
        %v970 = vpop.xlane.xlu0 %969
        %v971 = vadd.f32 %v927, %v928
        %972 = vadd.xlane.f32.xlu0 %v971
        %v973 = vpop.xlane.xlu0 %972
        %v974 = vadd.f32 %v929, %v930
        %975 = vadd.xlane.f32.xlu0 %v974
        %v976 = vpop.xlane.xlu0 %975
        %v977 = vadd.f32 %v931, %v932
        %978 = vadd.xlane.f32.xlu0 %v977
        %v979 = vpop.xlane.xlu0 %978
        %v980 = vadd.f32 %v933, %v934
        %981 = vadd.xlane.f32.xlu0 %v980
        %v982 = vpop.xlane.xlu0 %981
        %s983 = sld [smem:[#allocation2]]
        %v984 = vstv %s983
        %v985 = vadd.f32 %v937, %v984
        %v986 = vadd.f32 %v940, %v984
        %v987 = vadd.f32 %v943, %v984
        %v988 = vadd.f32 %v946, %v984
        %v989 = vadd.f32 %v949, %v984
        %v990 = vadd.f32 %v952, %v984
        %v991 = vadd.f32 %v955, %v984
        %v992 = vadd.f32 %v958, %v984
        %v993 = vadd.f32 %v961, %v984
        %v994 = vadd.f32 %v964, %v984
        %v995 = vadd.f32 %v967, %v984
        %v996 = vadd.f32 %v970, %v984
        %v997 = vadd.f32 %v973, %v984
        %v998 = vadd.f32 %v976, %v984
        %v999 = vadd.f32 %v979, %v984
        %v1000 = vadd.f32 %v982, %v984
        %vm1001 = vcmask 7168
        %1002 = vst.msk [vmem:[%s332] sm:$0xff] %vm1001, %v985
        %1003 = vst.msk [vmem:[%s332 + $0x8] sm:$0xff] %vm1001, %v986
        %1004 = vst.msk [vmem:[%s332 + $0x10] sm:$0xff] %vm1001, %v987
        %1005 = vst.msk [vmem:[%s332 + $0x18] sm:$0xff] %vm1001, %v988
        %1006 = vst.msk [vmem:[%s332 + $0x20] sm:$0xff] %vm1001, %v989
        %1007 = vst.msk [vmem:[%s332 + $0x28] sm:$0xff] %vm1001, %v990
        %1008 = vst.msk [vmem:[%s332 + $0x30] sm:$0xff] %vm1001, %v991
        %1009 = vst.msk [vmem:[%s332 + $0x38] sm:$0xff] %vm1001, %v992
        %1010 = vst.msk [vmem:[%s332 + $0x40] sm:$0xff] %vm1001, %v993
        %1011 = vst.msk [vmem:[%s332 + $0x48] sm:$0xff] %vm1001, %v994
        %1012 = vst.msk [vmem:[%s332 + $0x50] sm:$0xff] %vm1001, %v995
        %1013 = vst.msk [vmem:[%s332 + $0x58] sm:$0xff] %vm1001, %v996
        %1014 = vst.msk [vmem:[%s332 + $0x60] sm:$0xff] %vm1001, %v997
        %1015 = vst.msk [vmem:[%s332 + $0x68] sm:$0xff] %vm1001, %v998
        %1016 = vst.msk [vmem:[%s332 + $0x70] sm:$0xff] %vm1001, %v999
        %1017 = vst.msk [vmem:[%s332 + $0x78] sm:$0xff] %vm1001, %v1000
        %s1018 = sand.u32 %s168, 1
        %s1019 = sand.u32 %s168, 1
        %s1020 = smul.addr %s1019, 128
        %s1021 = scalar_lea.vmem [#allocation8], %s1020
        // Predicated region
        $region57: #{tpu_custom_call.1} parent=43 // pred_check
          %p1022 = pneg %p178
        $region58: #{tpu_custom_call.1} parent=43 // pred_check_branch
          %1024 = sbr.rel (%p1022) target = $region60
        $region59: #{tpu_custom_call.1} parent=43 // pred_region
          %s1025 = smul.u32 16, %s24
          %s1026 = ssub.s32 25, %s1025
          %p1027 = scmp.lt.s32.totalorder %s1026, 16
          %s1028 = scalar_select %p1027, %s1026, 16
          %s1029 = smul.u32 128, %s1028
          %p1030 = scmp.ne.s32.totalorder 0, %s1029
          %s1031 = smul.addr %s1025, 8
          %s1032 = scalar_lea.vmem %s6, %s1031
          // Predicated region
          $region61: #{tpu_custom_call.1} parent=59 // pred_check
            %p1033 = pneg %p1030
          $region62: #{tpu_custom_call.1} parent=59 // pred_check_branch
            %1035 = sbr.rel (%p1033) target = $region64
          $region63: #{tpu_custom_call.1} parent=59 // pred_region
            // Predicated region
            $region65: #{tpu_custom_call.1} parent=63 // pred_check
              _
            $region66: #{tpu_custom_call.1} parent=63 // pred_check_branch
              %1037 = sbr.rel (0) target = $region68
            $region67: #{tpu_custom_call.1} parent=63 // pred_region
              // Predicated region
              $region87: #{tpu_custom_call.1} parent=67 // pred_check
                _
              $region88: #{tpu_custom_call.1} parent=67 // pred_check_branch
                %1117 = sbr.rel (0) target = $region90
              $region89: #{tpu_custom_call.1} parent=67 // pred_region
                %s1118 = sshrl.u32 %s1028, 4
                // While loop
                $region91: #{tpu_custom_call.1} parent=89 // loop_pre_header
                  _
                $region92: #{tpu_custom_call.1} parent=89 // loop_header
                  %s1120 = sphi 0, %s1122
                  %p1121 = scmp.ge.s32.totalorder %s1120, %s1118
                  %s1125 = sphi 0, %s1162
                  %s1126 = sphi %s1021, %s1165
                  %s1127 = sphi %s1032, %s1166
                $region93: #{tpu_custom_call.1} parent=89 // loop_header_branch
                  %1124 = sbr.rel (%p1121) target = $region97
                $region94: #{tpu_custom_call.1} parent=89 // loop_body
                  %v1128 = vld [vmem:[%s1126] sm:$0xff]
                  %1129 = vst [vmem:[%s1127] sm:$0xff] %v1128
                  %v1130 = vld [vmem:[%s1126 + $0x8] sm:$0xff]
                  %1131 = vst [vmem:[%s1127 + $0x8] sm:$0xff] %v1130
                  %v1132 = vld [vmem:[%s1126 + $0x10] sm:$0xff]
                  %1133 = vst [vmem:[%s1127 + $0x10] sm:$0xff] %v1132
                  %v1134 = vld [vmem:[%s1126 + $0x18] sm:$0xff]
                  %1135 = vst [vmem:[%s1127 + $0x18] sm:$0xff] %v1134
                  %v1136 = vld [vmem:[%s1126 + $0x20] sm:$0xff]
                  %1137 = vst [vmem:[%s1127 + $0x20] sm:$0xff] %v1136
                  %v1138 = vld [vmem:[%s1126 + $0x28] sm:$0xff]
                  %1139 = vst [vmem:[%s1127 + $0x28] sm:$0xff] %v1138
                  %v1140 = vld [vmem:[%s1126 + $0x30] sm:$0xff]
                  %1141 = vst [vmem:[%s1127 + $0x30] sm:$0xff] %v1140
                  %v1142 = vld [vmem:[%s1126 + $0x38] sm:$0xff]
                  %1143 = vst [vmem:[%s1127 + $0x38] sm:$0xff] %v1142
                  %v1144 = vld [vmem:[%s1126 + $0x40] sm:$0xff]
                  %1145 = vst [vmem:[%s1127 + $0x40] sm:$0xff] %v1144
                  %v1146 = vld [vmem:[%s1126 + $0x48] sm:$0xff]
                  %1147 = vst [vmem:[%s1127 + $0x48] sm:$0xff] %v1146
                  %v1148 = vld [vmem:[%s1126 + $0x50] sm:$0xff]
                  %1149 = vst [vmem:[%s1127 + $0x50] sm:$0xff] %v1148
                  %v1150 = vld [vmem:[%s1126 + $0x58] sm:$0xff]
                  %1151 = vst [vmem:[%s1127 + $0x58] sm:$0xff] %v1150
                  %v1152 = vld [vmem:[%s1126 + $0x60] sm:$0xff]
                  %1153 = vst [vmem:[%s1127 + $0x60] sm:$0xff] %v1152
                  %v1154 = vld [vmem:[%s1126 + $0x68] sm:$0xff]
                  %1155 = vst [vmem:[%s1127 + $0x68] sm:$0xff] %v1154
                  %v1156 = vld [vmem:[%s1126 + $0x70] sm:$0xff]
                  %1157 = vst [vmem:[%s1127 + $0x70] sm:$0xff] %v1156
                  %v1158 = vld [vmem:[%s1126 + $0x78] sm:$0xff]
                  %1159 = vst [vmem:[%s1127 + $0x78] sm:$0xff] %v1158
                  %s1160 = sadd.s32 1, %s1125
                  %p1161 = scmp.ge.s32.totalorder %s1160, %s1118
                  %s1162 = scalar_select %p1161, 0, %s1160
                  %s1163 = smul.u32 %s1162, 128
                  %s1164 = smul.u32 %s1162, 128
                  %s1165 = scalar_lea.vmem %s1021, %s1163 [#allocation8]
                  %s1166 = scalar_lea.vmem %s1032, %s1164
                $region95: #{tpu_custom_call.1} parent=89 // loop_footer
                  %s1122 = sadd.s32 %s1120, 1
                $region96: #{tpu_custom_call.1} parent=89 // loop_footer_branch
                  %1119 = sbr.rel target = $region92
                $region97: #{tpu_custom_call.1} parent=89 // loop_exit
                  _
                %s1167 = sshrl.u32 %s1028, 4
                %s1168 = sand.u32 %s1028, 15
                %s1169 = smul.u32 %s1167, 16
                %s1170 = smul.u32 8, %s1169
                %s1171 = scalar_lea.vmem %s1021, %s1170 [#allocation8]
                %s1172 = smul.u32 8, %s1169
                %s1173 = scalar_lea.vmem %s1032, %s1172
                // While loop
                $region98: #{tpu_custom_call.1} parent=89 // loop_pre_header
                  _
                $region99: #{tpu_custom_call.1} parent=89 // loop_header
                  %s1175 = sphi 0, %s1177
                  %p1176 = scmp.ge.s32.totalorder %s1175, %s1168
                  %s1180 = sphi 0, %s1187
                  %s1181 = sphi %s1171, %s1190
                  %s1182 = sphi %s1173, %s1191
                $region100: #{tpu_custom_call.1} parent=89 // loop_header_branch
                  %1179 = sbr.rel (%p1176) target = $region104
                $region101: #{tpu_custom_call.1} parent=89 // loop_body
                  %v1183 = vld [vmem:[%s1181] sm:$0xff]
                  %1184 = vst [vmem:[%s1182] sm:$0xff] %v1183
                  %s1185 = sadd.s32 1, %s1180
                  %p1186 = scmp.ge.s32.totalorder %s1185, %s1168
                  %s1187 = scalar_select %p1186, 0, %s1185
                  %s1188 = smul.u32 %s1187, 8
                  %s1189 = smul.u32 %s1187, 8
                  %s1190 = scalar_lea.vmem %s1171, %s1188 [#allocation8]
                  %s1191 = scalar_lea.vmem %s1173, %s1189
                $region102: #{tpu_custom_call.1} parent=89 // loop_footer
                  %s1177 = sadd.s32 %s1175, 1
                $region103: #{tpu_custom_call.1} parent=89 // loop_footer_branch
                  %1174 = sbr.rel target = $region99
                $region104: #{tpu_custom_call.1} parent=89 // loop_exit
                  _
              $region90: #{tpu_custom_call.1} parent=67 // pred_fallthru
                _
              // Predicated region
              $region105: #{tpu_custom_call.1} parent=67 // pred_check
                _
              $region106: #{tpu_custom_call.1} parent=67 // pred_check_branch
                %1193 = sbr.rel target = $region108
              $region107: #{tpu_custom_call.1} parent=67 // pred_region
                _
              $region108: #{tpu_custom_call.1} parent=67 // pred_fallthru
                _
            $region68: #{tpu_custom_call.1} parent=63 // pred_fallthru
              _
            // Predicated region
            $region69: #{tpu_custom_call.1} parent=63 // pred_check
              _
            $region70: #{tpu_custom_call.1} parent=63 // pred_check_branch
              %1039 = sbr.rel target = $region72
            $region71: #{tpu_custom_call.1} parent=63 // pred_region
              %s1041 = ssub.s32 256, 1
              %s1042 = sshrl.u32 %s1028, 4
              // While loop
              $region73: #{tpu_custom_call.1} parent=71 // loop_pre_header
                _
              $region74: #{tpu_custom_call.1} parent=71 // loop_header
                %s1044 = sphi 0, %s1046
                %p1045 = scmp.ge.s32.totalorder %s1044, %s1042
                %s1049 = sphi 0, %s1086
                %s1050 = sphi %s1021, %s1089
                %s1051 = sphi %s1032, %s1090
              $region75: #{tpu_custom_call.1} parent=71 // loop_header_branch
                %1048 = sbr.rel (%p1045) target = $region79
              $region76: #{tpu_custom_call.1} parent=71 // loop_body
                %v1052 = vld [vmem:[%s1050] sm:%s1041]
                %1053 = vst [vmem:[%s1051] sm:%s1041] %v1052
                %v1054 = vld [vmem:[%s1050 + $0x8] sm:%s1041]
                %1055 = vst [vmem:[%s1051 + $0x8] sm:%s1041] %v1054
                %v1056 = vld [vmem:[%s1050 + $0x10] sm:%s1041]
                %1057 = vst [vmem:[%s1051 + $0x10] sm:%s1041] %v1056
                %v1058 = vld [vmem:[%s1050 + $0x18] sm:%s1041]
                %1059 = vst [vmem:[%s1051 + $0x18] sm:%s1041] %v1058
                %v1060 = vld [vmem:[%s1050 + $0x20] sm:%s1041]
                %1061 = vst [vmem:[%s1051 + $0x20] sm:%s1041] %v1060
                %v1062 = vld [vmem:[%s1050 + $0x28] sm:%s1041]
                %1063 = vst [vmem:[%s1051 + $0x28] sm:%s1041] %v1062
                %v1064 = vld [vmem:[%s1050 + $0x30] sm:%s1041]
                %1065 = vst [vmem:[%s1051 + $0x30] sm:%s1041] %v1064
                %v1066 = vld [vmem:[%s1050 + $0x38] sm:%s1041]
                %1067 = vst [vmem:[%s1051 + $0x38] sm:%s1041] %v1066
                %v1068 = vld [vmem:[%s1050 + $0x40] sm:%s1041]
                %1069 = vst [vmem:[%s1051 + $0x40] sm:%s1041] %v1068
                %v1070 = vld [vmem:[%s1050 + $0x48] sm:%s1041]
                %1071 = vst [vmem:[%s1051 + $0x48] sm:%s1041] %v1070
                %v1072 = vld [vmem:[%s1050 + $0x50] sm:%s1041]
                %1073 = vst [vmem:[%s1051 + $0x50] sm:%s1041] %v1072
                %v1074 = vld [vmem:[%s1050 + $0x58] sm:%s1041]
                %1075 = vst [vmem:[%s1051 + $0x58] sm:%s1041] %v1074
                %v1076 = vld [vmem:[%s1050 + $0x60] sm:%s1041]
                %1077 = vst [vmem:[%s1051 + $0x60] sm:%s1041] %v1076
                %v1078 = vld [vmem:[%s1050 + $0x68] sm:%s1041]
                %1079 = vst [vmem:[%s1051 + $0x68] sm:%s1041] %v1078
                %v1080 = vld [vmem:[%s1050 + $0x70] sm:%s1041]
                %1081 = vst [vmem:[%s1051 + $0x70] sm:%s1041] %v1080
                %v1082 = vld [vmem:[%s1050 + $0x78] sm:%s1041]
                %1083 = vst [vmem:[%s1051 + $0x78] sm:%s1041] %v1082
                %s1084 = sadd.s32 1, %s1049
                %p1085 = scmp.ge.s32.totalorder %s1084, %s1042
                %s1086 = scalar_select %p1085, 0, %s1084
                %s1087 = smul.u32 %s1086, 128
                %s1088 = smul.u32 %s1086, 128
                %s1089 = scalar_lea.vmem %s1021, %s1087 [#allocation8]
                %s1090 = scalar_lea.vmem %s1032, %s1088
              $region77: #{tpu_custom_call.1} parent=71 // loop_footer
                %s1046 = sadd.s32 %s1044, 1
              $region78: #{tpu_custom_call.1} parent=71 // loop_footer_branch
                %1043 = sbr.rel target = $region74
              $region79: #{tpu_custom_call.1} parent=71 // loop_exit
                _
              %s1091 = sshrl.u32 %s1028, 4
              %s1092 = sand.u32 %s1028, 15
              %s1093 = smul.u32 %s1091, 16
              %s1094 = smul.u32 8, %s1093
              %s1095 = scalar_lea.vmem %s1021, %s1094 [#allocation8]
              %s1096 = smul.u32 8, %s1093
              %s1097 = scalar_lea.vmem %s1032, %s1096
              // While loop
              $region80: #{tpu_custom_call.1} parent=71 // loop_pre_header
                _
              $region81: #{tpu_custom_call.1} parent=71 // loop_header
                %s1099 = sphi 0, %s1101
                %p1100 = scmp.ge.s32.totalorder %s1099, %s1092
                %s1104 = sphi 0, %s1111
                %s1105 = sphi %s1095, %s1114
                %s1106 = sphi %s1097, %s1115
              $region82: #{tpu_custom_call.1} parent=71 // loop_header_branch
                %1103 = sbr.rel (%p1100) target = $region86
              $region83: #{tpu_custom_call.1} parent=71 // loop_body
                %v1107 = vld [vmem:[%s1105] sm:%s1041]
                %1108 = vst [vmem:[%s1106] sm:%s1041] %v1107
                %s1109 = sadd.s32 1, %s1104
                %p1110 = scmp.ge.s32.totalorder %s1109, %s1092
                %s1111 = scalar_select %p1110, 0, %s1109
                %s1112 = smul.u32 %s1111, 8
                %s1113 = smul.u32 %s1111, 8
                %s1114 = scalar_lea.vmem %s1095, %s1112 [#allocation8]
                %s1115 = scalar_lea.vmem %s1097, %s1113
              $region84: #{tpu_custom_call.1} parent=71 // loop_footer
                %s1101 = sadd.s32 %s1099, 1
              $region85: #{tpu_custom_call.1} parent=71 // loop_footer_branch
                %1098 = sbr.rel target = $region81
              $region86: #{tpu_custom_call.1} parent=71 // loop_exit
                _
            $region72: #{tpu_custom_call.1} parent=63 // pred_fallthru
              _
          $region64: #{tpu_custom_call.1} parent=59 // pred_fallthru
            _
          %1194 = vnop
        $region60: #{tpu_custom_call.1} parent=43 // pred_fallthru
          _
      $region44: #{tpu_custom_call.1} parent=5 // pred_fallthru
        _
      %p1195 = scmp.le.s32.totalorder 2, %s19
      // Predicated region
      $region109: #{tpu_custom_call.1} parent=5 // pred_check
        %p1196 = pneg %p1195
      $region110: #{tpu_custom_call.1} parent=5 // pred_check_branch
        %1198 = sbr.rel (%p1196) target = $region112
      $region111: #{tpu_custom_call.1} parent=5 // pred_region
        %s1199 = ssub.s32 %s19, 2
        // Predicated region
        $region113: #{tpu_custom_call.1} parent=111 // pred_check
          %p1200 = pneg %p184
        $region114: #{tpu_custom_call.1} parent=111 // pred_check_branch
          %1202 = sbr.rel (%p1200) target = $region116
        $region115: #{tpu_custom_call.1} parent=111 // pred_region
          %s1203 = sand.u32 %s169, 1
          %s1204 = sand.u32 %s169, 1
          %s1205 = smul.addr %s1204, 128
          %s1206 = scalar_lea.vmem [#allocation8], %s1205
        $region116: #{tpu_custom_call.1} parent=111 // pred_fallthru
          _
      $region112: #{tpu_custom_call.1} parent=5 // pred_fallthru
        _
    $region6: #{tpu_custom_call.1} parent=1 // loop_footer
      %s23 = sadd.s32 1, %s19
    $region7: #{tpu_custom_call.1} parent=1 // loop_footer_branch
      %18 = sbr.rel target = $region3
    $region8: #{tpu_custom_call.1} parent=1 // loop_exit
      _
    %1207 = vsyncpa [#allocation4], 1
    %s1208 = scalar_lea.sflag [#allocation4], 1
    %1209 = vsyncpa %s1208, 1
    %1210 = vsyncpa [#allocation6], 1
    %s1211 = scalar_lea.sflag [#allocation6], 1
    %1212 = vsyncpa %s1211, 1

</llo_original>
